<compile_context>
chip_gen: v7x
topology: tpu7x:2x2x1
jax: 0.10.0
libtpu: 0.0.40
codegen_flags: <defaults>
</compile_context>

<pallas_src>
from functools import partial

import numpy as np
import jax
import jax.numpy as jnp
from jax import lax
from jax.experimental import pallas as pl
from jax.experimental.pallas import tpu as pltpu


def _round_up(x, m):
    return ((x + m - 1) // m) * m


def _pick_tile(dim, cands=(512, 256, 128)):
    for c in cands:
        if dim % c == 0:
            return c
    return dim


# -------------------- Per-channel scale vector (Pallas) --------------------- #
# scale_o = (gain / sqrt(fan_in)) / (eps + ||w_o|| / sqrt(fan_in))

def _channel_scale_kernel(w_ref, s_ref, ssq_ref, *, fan_in, gain, eps):
    @pl.when(pl.program_id(1) == 0)
    def _():
        ssq_ref[...] = jnp.zeros_like(ssq_ref)

    w = w_ref[...].astype(jnp.float32)
    ssq_ref[...] += jnp.sum(w * w, axis=1, keepdims=True)

    @pl.when(pl.program_id(1) == pl.num_programs(1) - 1)
    def _():
        inv_rf = 1.0 / float(np.sqrt(fan_in))
        nrm = jnp.sqrt(ssq_ref[...])
        s_ref[...] = (gain * inv_rf) / (eps + nrm * inv_rf)


def _channel_scale(w2d, *, fan_in, gain, eps):
    """w2d: (Npad, Kpad) raw weight (zero-padded rows/cols allowed).
    Returns the per-channel scale as a (1, Npad) f32 row vector."""
    Npad, Kpad = w2d.shape
    tn = 256 if Npad % 256 == 0 else 128
    tk = _pick_tile(Kpad)
    grid = (Npad // tn, Kpad // tk)
    scale_col = pl.pallas_call(
        partial(_channel_scale_kernel, fan_in=fan_in, gain=gain, eps=eps),
        out_shape=jax.ShapeDtypeStruct((Npad, 1), jnp.float32),
        grid_spec=pltpu.PrefetchScalarGridSpec(
            num_scalar_prefetch=0,
            grid=grid,
            in_specs=[pl.BlockSpec((tn, tk), lambda i, k: (i, k))],
            out_specs=pl.BlockSpec((tn, 1), lambda i, k: (i, 0)),
            scratch_shapes=[pltpu.VMEM((tn, 1), jnp.float32)]),
        compiler_params=pltpu.CompilerParams(
            dimension_semantics=("parallel", "arbitrary")),
    )(w2d)
    return scale_col.reshape(1, Npad)


# ------------------- Tiled matmul with epilogue scaling --------------------- #

def _matmul_scale_kernel(x_ref, w_ref, s_ref, o_ref, acc_ref):
    @pl.when(pl.program_id(2) == 0)
    def _():
        acc_ref[...] = jnp.zeros_like(acc_ref)

    # x (tm, tk) . w (tn, tk) contracting the last dims (x @ w.T); raw weight RHS.
    acc_ref[...] += lax.dot_general(
        x_ref[...], w_ref[...],
        dimension_numbers=(((1,), (1,)), ((), ())),
        preferred_element_type=jnp.float32,
        precision=lax.Precision.HIGHEST)

    @pl.when(pl.program_id(2) == pl.num_programs(2) - 1)
    def _():
        # Fold the per-channel weight normalization into the epilogue (no scaled
        # weight ever written to / re-read from HBM).
        o_ref[...] = (acc_ref[...] * s_ref[...]).astype(o_ref.dtype)


def _linear_forward(x, w, *, gain, eps):
    lead = x.shape[:-1]
    K = x.shape[-1]
    N, Kw = w.shape
    assert K == Kw
    Npad = _round_up(N, 128)            # lane-dense output stores
    Kpad = _round_up(K, 128)            # keep tk independent of irregular K

    w2d = w
    if Npad != N or Kpad != K:
        w2d = jnp.pad(w, ((0, Npad - N), (0, Kpad - K)))
    scale = _channel_scale(w2d, fan_in=K, gain=gain, eps=eps)       # (1, Npad)

    x2d = x.reshape(-1, K)
    if Kpad != K:
        x2d = jnp.pad(x2d, ((0, 0), (0, Kpad - K)))
    wmm = w2d.astype(x.dtype)                                       # raw weight RHS

    M = x2d.shape[0]
    tm = min(512, _round_up(M, 8))
    tn = _pick_tile(Npad)
    tk = _pick_tile(Kpad)
    # Double-buffered footprint at tm=tn=tk=512 f32 is ~7 MiB -> fits every
    # generation's default scoped VMEM; no vmem_limit_bytes override needed.
    grid = (pl.cdiv(M, tm), Npad // tn, Kpad // tk)

    y = pl.pallas_call(
        _matmul_scale_kernel,
        out_shape=jax.ShapeDtypeStruct((M, Npad), x.dtype),
        grid_spec=pltpu.PrefetchScalarGridSpec(
            num_scalar_prefetch=0,
            grid=grid,
            in_specs=[
                pl.BlockSpec((tm, tk), lambda i, j, k: (i, k)),     # x row tile
                pl.BlockSpec((tn, tk), lambda i, j, k: (j, k)),     # raw weight tile
                pl.BlockSpec((1, tn), lambda i, j, k: (0, j)),      # channel scale
            ],
            out_specs=pl.BlockSpec((tm, tn), lambda i, j, k: (i, j)),
            scratch_shapes=[pltpu.VMEM((tm, tn), jnp.float32)]),
        compiler_params=pltpu.CompilerParams(
            dimension_semantics=("parallel", "parallel", "arbitrary")),
    )(x2d, wmm, scale)
    return y[:, :N].reshape(lead + (N,))


# -------------------- Conv path: halo-slab tiled conv2d --------------------- #

def _conv_kernel(x_hbm, w_ref, s_ref, o_ref, slab_ref, acc_ref, sem,
                 *, kh, kw, th, Wo):
    b = pl.program_id(0)
    h = pl.program_id(1)
    j = pl.program_id(2)

    # DMA the (th + kh - 1)-row halo slab for this (batch, H-tile) once; reuse it
    # across all N tiles (j is the innermost, sequential grid axis).
    @pl.when(j == 0)
    def _():
        cp = pltpu.make_async_copy(
            x_hbm.at[b, pl.ds(h * th, th + kh - 1)], slab_ref, sem.at[0])
        cp.start()
        cp.wait()

    scale = s_ref[...]                                   # (1, tn) f32

    def row_body(r, carry):
        acc_ref[...] = jnp.zeros_like(acc_ref)           # (Wo, tn) f32 VMEM acc
        for i in range(kh):
            row = slab_ref[r + i]                        # (Wp, C)
            for t in range(kw):
                lhs = row[t:t + Wo, :]                   # (Wo, C) 2-D window slice
                acc_ref[...] += jnp.dot(
                    lhs, w_ref[i * kw + t],
                    preferred_element_type=jnp.float32,
                    precision=lax.Precision.HIGHEST)
        # TODO(synk): widen the MXU contraction to C*kw (row im2col in VMEM) for
        # small channel counts; with C on the order of 4-16 the MXU depth is low.
        o_ref[0, r] = (acc_ref[...] * scale).astype(o_ref.dtype)
        return carry

    lax.fori_loop(0, th, row_body, 0)


def _conv_forward(x_nchw, w_oihw, *, gain, eps):
    B, C, H, W = x_nchw.shape
    O, Cw, kh, kw = w_oihw.shape
    assert C == Cw
    pad = kw // 2               # torch padding=(kw//2,) broadcasts to both spatial dims
    fan_in = C * kh * kw
    Npad = _round_up(O, 128)

    # Per-output-channel scale vector from the raw weight (Pallas reduction).
    Kpat = _round_up(fan_in, 128)
    w2d = jnp.pad(w_oihw.reshape(O, fan_in), ((0, Npad - O), (0, Kpat - fan_in)))
    scale = _channel_scale(w2d, fan_in=fan_in, gain=gain, eps=eps)   # (1, Npad)

    # Raw weight rearranged to (kh*kw, C, Npad) so the kernel indexes one tap at a time.
    wk = jnp.transpose(w_oihw, (2, 3, 1, 0)).reshape(kh * kw, C, O)
    if Npad != O:
        wk = jnp.pad(wk, ((0, 0), (0, 0), (0, Npad - O)))
    wk = wk.astype(x_nchw.dtype)

    # NHWC + spatial zero padding; extra bottom rows so the H tiling divides evenly.
    Wp = W + 2 * pad
    Ho = H + 2 * pad - kh + 1
    Wo = Wp - kw + 1

    itemsize = jnp.dtype(x_nchw.dtype).itemsize
    rows_budget = max(1, (2 * 1024 * 1024) // (Wp * C * itemsize) - (kh - 1))
    th = int(min(Ho, rows_budget))
    if th >= 8:
        th = (th // 8) * 8
    Ho_pad = _round_up(Ho, th)

    xp = jnp.transpose(x_nchw, (0, 2, 3, 1))                        # NHWC
    xp = jnp.pad(xp, ((0, 0), (pad, pad + (Ho_pad - Ho)), (pad, pad), (0, 0)))
    # xp: (B, Ho_pad + kh - 1, Wp, C)

    tn = 256 if Npad % 256 == 0 else 128
    S = th + kh - 1
    grid = (B, Ho_pad // th, Npad // tn)

    y = pl.pallas_call(
        partial(_conv_kernel, kh=kh, kw=kw, th=th, Wo=Wo),
        out_shape=jax.ShapeDtypeStruct((B, Ho_pad, Wo, Npad), x_nchw.dtype),
        grid_spec=pltpu.PrefetchScalarGridSpec(
            num_scalar_prefetch=0,
            grid=grid,
            in_specs=[
                pl.BlockSpec(memory_space=pl.ANY),                        # x in HBM
                pl.BlockSpec((kh * kw, C, tn), lambda b, h, j: (0, 0, j)),  # raw weight
                pl.BlockSpec((1, tn), lambda b, h, j: (0, j)),            # channel scale
            ],
            out_specs=pl.BlockSpec((1, th, Wo, tn), lambda b, h, j: (b, h, 0, j)),
            scratch_shapes=[
                pltpu.VMEM((S, Wp, C), x_nchw.dtype),      # halo slab
                pltpu.VMEM((Wo, tn), jnp.float32),         # per-row f32 accumulator
                pltpu.SemaphoreType.DMA((1,)),
            ]),
        compiler_params=pltpu.CompilerParams(
            dimension_semantics=("parallel", "parallel", "arbitrary")),
    )(xp, wk, scale)

    y = y[:, :Ho, :, :O]
    return jnp.transpose(y, (0, 3, 1, 2))                 # back to NCHW


# ------------------------------ Module wrapper ------------------------------ #

class MPGeoLinearPallas:
    """JAX/Pallas equivalent of MP_GeoLinear (forward only, eval mode)."""
    # TODO(synk): training-mode in-place self.weight.copy_(normalize(w)) is a stateful
    # parameter update with no effect on the forward output; not emitted.
    # TODO(synk): UninitializedParameter lazy init / state-dict / deepcopy hooks are
    # framework plumbing with no Pallas equivalent.

    def __init__(self, in_channels, out_channels, kernel=(), *, key):
        self.in_channels = in_channels
        self.out_channels = out_channels
        self.kernel = tuple(kernel)
        shape = (out_channels, in_channels, *self.kernel)
        # torch.nn.init._no_grad_normal_(weight, 0, 1) -> standard normal
        self.weight = jax.random.normal(key, shape, dtype=jnp.float32)

    def __call__(self, x, gain=1.0, eps=1e-4):
        w = self.weight
        if w.ndim == 2:
            return _linear_forward(x, w, gain=gain, eps=eps)
        assert w.ndim == 4
        return _conv_forward(x, w, gain=gain, eps=eps)


# ------------------------------ Pure-JAX reference -------------------------- #

def _ref_forward(x, w, gain=1.0, eps=1e-4):
    wf = w.astype(jnp.float32)
    dims = tuple(range(1, wf.ndim))
    fan_in = int(np.prod(wf.shape[1:]))
    norm = jnp.sqrt(jnp.sum(wf * wf, axis=dims, keepdims=True))
    norm = eps + norm * (1.0 / np.sqrt(fan_in))
    wf = wf / norm
    wf = wf * (gain / np.sqrt(fan_in))
    wf = wf.astype(x.dtype)
    if wf.ndim == 2:
        return jnp.matmul(x, wf.T, precision=lax.Precision.HIGHEST)
    pad = wf.shape[-1] // 2
    return lax.conv_general_dilated(
        x, wf, window_strides=(1, 1), padding=[(pad, pad), (pad, pad)],
        dimension_numbers=("NCHW", "OIHW", "NCHW"),
        precision=lax.Precision.HIGHEST)


# ----------------------------------- Main ----------------------------------- #

if __name__ == "__main__":
    key = jax.random.PRNGKey(0)
    k_wl, k_xl, k_wc, k_xc = jax.random.split(key, 4)

    # --- Linear case: MP_GeoLinear(in=32, out=16), x shape (B=2, S=8, 32) ---
    lin = MPGeoLinearPallas(32, 16, kernel=(), key=k_wl)
    x_lin = jax.random.normal(k_xl, (2, 8, 32), dtype=jnp.float32)
    y_lin = jax.block_until_ready(lin(x_lin, gain=1.0))
    y_lin_ref = _ref_forward(x_lin, lin.weight, gain=1.0)
    assert y_lin.shape == (2, 8, 16)
    assert np.allclose(np.asarray(y_lin), np.asarray(y_lin_ref),
                       atol=5e-3, rtol=5e-3)

    # --- Conv case: MP_GeoLinear(in=4, out=8, kernel=[3,3]), x NCHW (2,4,16,16) ---
    conv = MPGeoLinearPallas(4, 8, kernel=(3, 3), key=k_wc)
    x_conv = jax.random.normal(k_xc, (2, 4, 16, 16), dtype=jnp.float32)
    y_conv = jax.block_until_ready(conv(x_conv, gain=1.0))
    y_conv_ref = _ref_forward(x_conv, conv.weight, gain=1.0)
    assert y_conv.shape == (2, 8, 16, 16)
    assert np.allclose(np.asarray(y_conv), np.asarray(y_conv_ref),
                       atol=5e-3, rtol=5e-3)

    print("KERNEL_OK")
</pallas_src>

<mosaic_0001>
module attributes {stable_mosaic.version = 11 : i64} {
  func.func @_channel_scale_kernel(%arg0: i32, %arg1: i32, %arg2: memref<128x128xf32, #tpu.memory_space<vmem>>, %arg3: memref<128x1xf32, #tpu.memory_space<vmem>>, %arg4: memref<128x1xf32, #tpu.memory_space<vmem>>) attributes {dimension_semantics = [#tpu.dimension_semantics<parallel>, #tpu.dimension_semantics<arbitrary>], iteration_bounds = array<i64: 1, 1>, scalar_prefetch = 0 : i64, scratch_operands = 1 : i64, tpu.core_type = #tpu.core_type<tc>, window_params = [{transform_indices = @transform_0, window_bounds = array<i64: 128, 128>}, {transform_indices = @transform_1, window_bounds = array<i64: 128, 1>}]} {
    %c0_i32 = arith.constant 0 : i32
    %0 = arith.cmpi eq, %arg1, %c0_i32 : i32
    %1 = arith.extui %0 : i1 to i32
    %c0_i32_0 = arith.constant 0 : i32
    %2 = arith.cmpi ne, %1, %c0_i32_0 : i32
    scf.if %2 {
      %cst_8 = arith.constant 0.000000e+00 : f32
      %13 = vector.broadcast %cst_8 : f32 to vector<128x1xf32>
      %c0_9 = arith.constant 0 : index
      %c0_10 = arith.constant 0 : index
      %14 = vector.load %arg4[%c0_9, %c0_10] : memref<128x1xf32, #tpu.memory_space<vmem>>, vector<128x1xf32>
      tpu.vector_store %arg4[%c0_9, %c0_10], %13 {strides = array<i32>} : memref<128x1xf32, #tpu.memory_space<vmem>>, vector<128x1xf32>,
    } else {
    }
    %c0 = arith.constant 0 : index
    %c0_1 = arith.constant 0 : index
    %3 = vector.load %arg2[%c0, %c0_1] : memref<128x128xf32, #tpu.memory_space<vmem>>, vector<128x128xf32>
    %c0_2 = arith.constant 0 : index
    %c0_3 = arith.constant 0 : index
    %4 = vector.load %arg4[%c0_2, %c0_3] : memref<128x1xf32, #tpu.memory_space<vmem>>, vector<128x1xf32>
    %5 = arith.mulf %3, %3 : vector<128x128xf32>
    %cst = arith.constant dense<0.000000e+00> : vector<128xf32>
    %6 = vector.multi_reduction <add>, %5, %cst [1] : vector<128x128xf32> to vector<128xf32>
    %7 = vector.shape_cast %6 : vector<128xf32> to vector<128x1xf32>
    %8 = arith.addf %4, %7 : vector<128x1xf32>
    %c0_4 = arith.constant 0 : index
    %c0_5 = arith.constant 0 : index
    %9 = vector.load %arg4[%c0_4, %c0_5] : memref<128x1xf32, #tpu.memory_space<vmem>>, vector<128x1xf32>
    tpu.vector_store %arg4[%c0_4, %c0_5], %8 {strides = array<i32>} : memref<128x1xf32, #tpu.memory_space<vmem>>, vector<128x1xf32>,
    %c0_i32_6 = arith.constant 0 : i32
    %10 = arith.cmpi eq, %arg1, %c0_i32_6 : i32
    %11 = arith.extui %10 : i1 to i32
    %c0_i32_7 = arith.constant 0 : i32
    %12 = arith.cmpi ne, %11, %c0_i32_7 : i32
    scf.if %12 {
      %c0_8 = arith.constant 0 : index
      %c0_9 = arith.constant 0 : index
      %13 = vector.load %arg4[%c0_8, %c0_9] : memref<128x1xf32, #tpu.memory_space<vmem>>, vector<128x1xf32>
      %14 = math.sqrt %13 : vector<128x1xf32>
      %cst_10 = arith.constant 0.176776692 : f32
      %15 = vector.broadcast %cst_10 : f32 to vector<128x1xf32>
      %16 = arith.mulf %14, %15 : vector<128x1xf32>
      %cst_11 = arith.constant 9.99999974E-5 : f32
      %17 = vector.broadcast %cst_11 : f32 to vector<128x1xf32>
      %18 = arith.addf %17, %16 : vector<128x1xf32>
      %cst_12 = arith.constant 0.176776692 : f32
      %19 = vector.broadcast %cst_12 : f32 to vector<128x1xf32>
      %20 = arith.divf %19, %18 : vector<128x1xf32>
      %c0_13 = arith.constant 0 : index
      %c0_14 = arith.constant 0 : index
      %21 = vector.load %arg3[%c0_13, %c0_14] : memref<128x1xf32, #tpu.memory_space<vmem>>, vector<128x1xf32>
      tpu.vector_store %arg3[%c0_13, %c0_14], %20 {strides = array<i32>} : memref<128x1xf32, #tpu.memory_space<vmem>>, vector<128x1xf32>,
    } else {
    }
    return
  }
  func.func @transform_0(%arg0: i32, %arg1: i32) -> (i32, i32) {
    %c0_i32 = arith.constant 0 : i32
    return %arg0, %arg1 : i32, i32
  }
  func.func @transform_1(%arg0: i32, %arg1: i32) -> (i32, i32) {
    %c0_i32 = arith.constant 0 : i32
    %c0_i32_0 = arith.constant 0 : i32
    return %arg0, %c0_i32 : i32, i32
  }
}

</mosaic_0001>

<llo_original>
// kernel: tpu_custom_call.1
$region0: #{tpu_custom_call.1}
  #allocation0 [shape = 'u32[]', space=smem, size = 0x4, offset = 0x4, fixed_abs, tag = 'smem constant byte address 0x4 - core index']
  #allocation1 [shape = 'u32[144,128]{1,0:T(1,128)}', space=vmem, size = 0x12000, scoped, tag = 'internal scratch']
  #allocation2 [shape = 'f32[128,1]{1,0:T(8,128)}', space=vmem, size = 0x10000, scoped, tag = 'scratch operand']
  %s0 = inlined_call_operand.hbm [shape: f32[128,128], index: 0, kind: input, shape index: {}]
  %s1 = inlined_call_operand.vmem [shape: f32[128,1], index: 1, kind: output, shape index: {}]
  %s2 = sld [smem:[#allocation0]]
  $region26: #{tpu_custom_call.1} parent=0
    _
  %s4 = ssub.s32 1, %s2
  %s5 = scalar_select 0, %s4, %s2
  $region1: #{tpu_custom_call.1} parent=0
    #allocation3 [shape = 'u8[65536]{0}', space=vmem, size = 0x10000, scoped, tag = 'input window, operand 0, single buffered']
    #allocation4 [shape = 's32[1]{0}', space=sflag, size = 0x4, scoped, tag = 'scoped memory for tpu_custom_call.1']
    %6 = vsyncpa [#allocation4], 0
    // Predicated region
    $region2: #{tpu_custom_call.1} parent=1 // pred_check
      _
    $region3: #{tpu_custom_call.1} parent=1 // pred_check_branch
      %8 = sbr.rel (0) target = $region5
    $region4: #{tpu_custom_call.1} parent=1 // pred_region
      %s10 = ssub.s32 2048, 2048
      %11 = vsyncadd [#allocation4], %s10
      %s12 = sshll.u32 [#allocation3], 4
      %s13 = int_to_ptr.vmem [resolvable:$true] %s12
      %18 = dma.hbm_to_vmem [thread:$0]  %s0, 2048, %s13, [#allocation4], 128, 128, 8
    $region5: #{tpu_custom_call.1} parent=1 // pred_fallthru
      _
    // Predicated region
    $region6: #{tpu_custom_call.1} parent=1 // pred_check
      _
    $region7: #{tpu_custom_call.1} parent=1 // pred_check_branch
      %20 = sbr.rel (0) target = $region9
    $region8: #{tpu_custom_call.1} parent=1 // pred_region
      %21 = dma.done [#allocation4], 2048
    $region9: #{tpu_custom_call.1} parent=1 // pred_fallthru
      _
    %p22 = scmp.eq.s32.totalorder 0, 0
    // Predicated region
    $region10: #{tpu_custom_call.1} parent=1 // pred_check
      %p23 = pneg %p22
    $region11: #{tpu_custom_call.1} parent=1 // pred_check_branch
      %25 = sbr.rel (%p23) target = $region13
    $region12: #{tpu_custom_call.1} parent=1 // pred_region
      %vm26 = vcmask 7168
      %27 = vst.msk [vmem:[#allocation2] sm:$0xff] %vm26, 0.0
      %28 = vst.msk [vmem:[#allocation2 + $0x8] sm:$0xff] %vm26, 0.0
      %29 = vst.msk [vmem:[#allocation2 + $0x10] sm:$0xff] %vm26, 0.0
      %30 = vst.msk [vmem:[#allocation2 + $0x18] sm:$0xff] %vm26, 0.0
      %31 = vst.msk [vmem:[#allocation2 + $0x20] sm:$0xff] %vm26, 0.0
      %32 = vst.msk [vmem:[#allocation2 + $0x28] sm:$0xff] %vm26, 0.0
      %33 = vst.msk [vmem:[#allocation2 + $0x30] sm:$0xff] %vm26, 0.0
      %34 = vst.msk [vmem:[#allocation2 + $0x38] sm:$0xff] %vm26, 0.0
      %35 = vst.msk [vmem:[#allocation2 + $0x40] sm:$0xff] %vm26, 0.0
      %36 = vst.msk [vmem:[#allocation2 + $0x48] sm:$0xff] %vm26, 0.0
      %37 = vst.msk [vmem:[#allocation2 + $0x50] sm:$0xff] %vm26, 0.0
      %38 = vst.msk [vmem:[#allocation2 + $0x58] sm:$0xff] %vm26, 0.0
      %39 = vst.msk [vmem:[#allocation2 + $0x60] sm:$0xff] %vm26, 0.0
      %40 = vst.msk [vmem:[#allocation2 + $0x68] sm:$0xff] %vm26, 0.0
      %41 = vst.msk [vmem:[#allocation2 + $0x70] sm:$0xff] %vm26, 0.0
      %42 = vst.msk [vmem:[#allocation2 + $0x78] sm:$0xff] %vm26, 0.0
    $region13: #{tpu_custom_call.1} parent=1 // pred_fallthru
      _
    %v43 = vld [vmem:[#allocation3] sm:$0xff]
    %v44 = vld [vmem:[#allocation3 + $0x8] sm:$0xff]
    %v45 = vld [vmem:[#allocation3 + $0x10] sm:$0xff]
    %v46 = vld [vmem:[#allocation3 + $0x18] sm:$0xff]
    %v47 = vld [vmem:[#allocation3 + $0x20] sm:$0xff]
    %v48 = vld [vmem:[#allocation3 + $0x28] sm:$0xff]
    %v49 = vld [vmem:[#allocation3 + $0x30] sm:$0xff]
    %v50 = vld [vmem:[#allocation3 + $0x38] sm:$0xff]
    %v51 = vld [vmem:[#allocation3 + $0x40] sm:$0xff]
    %v52 = vld [vmem:[#allocation3 + $0x48] sm:$0xff]
    %v53 = vld [vmem:[#allocation3 + $0x50] sm:$0xff]
    %v54 = vld [vmem:[#allocation3 + $0x58] sm:$0xff]
    %v55 = vld [vmem:[#allocation3 + $0x60] sm:$0xff]
    %v56 = vld [vmem:[#allocation3 + $0x68] sm:$0xff]
    %v57 = vld [vmem:[#allocation3 + $0x70] sm:$0xff]
    %v58 = vld [vmem:[#allocation3 + $0x78] sm:$0xff]
    %v59 = vld [vmem:[#allocation2] sm:$0xff]
    %v60 = vld [vmem:[#allocation2 + $0x8] sm:$0xff]
    %v61 = vld [vmem:[#allocation2 + $0x10] sm:$0xff]
    %v62 = vld [vmem:[#allocation2 + $0x18] sm:$0xff]
    %v63 = vld [vmem:[#allocation2 + $0x20] sm:$0xff]
    %v64 = vld [vmem:[#allocation2 + $0x28] sm:$0xff]
    %v65 = vld [vmem:[#allocation2 + $0x30] sm:$0xff]
    %v66 = vld [vmem:[#allocation2 + $0x38] sm:$0xff]
    %v67 = vld [vmem:[#allocation2 + $0x40] sm:$0xff]
    %v68 = vld [vmem:[#allocation2 + $0x48] sm:$0xff]
    %v69 = vld [vmem:[#allocation2 + $0x50] sm:$0xff]
    %v70 = vld [vmem:[#allocation2 + $0x58] sm:$0xff]
    %v71 = vld [vmem:[#allocation2 + $0x60] sm:$0xff]
    %v72 = vld [vmem:[#allocation2 + $0x68] sm:$0xff]
    %v73 = vld [vmem:[#allocation2 + $0x70] sm:$0xff]
    %v74 = vld [vmem:[#allocation2 + $0x78] sm:$0xff]
    %v75 = vmul.f32 %v43, %v43
    %v76 = vmul.f32 %v44, %v44
    %v77 = vmul.f32 %v45, %v45
    %v78 = vmul.f32 %v46, %v46
    %v79 = vmul.f32 %v47, %v47
    %v80 = vmul.f32 %v48, %v48
    %v81 = vmul.f32 %v49, %v49
    %v82 = vmul.f32 %v50, %v50
    %v83 = vmul.f32 %v51, %v51
    %v84 = vmul.f32 %v52, %v52
    %v85 = vmul.f32 %v53, %v53
    %v86 = vmul.f32 %v54, %v54
    %v87 = vmul.f32 %v55, %v55
    %v88 = vmul.f32 %v56, %v56
    %v89 = vmul.f32 %v57, %v57
    %v90 = vmul.f32 %v58, %v58
    %91 = vadd.xlane.f32.xlu0 %v75
    %v92 = vpop.xlane.xlu0 %91
    %93 = vadd.xlane.f32.xlu0 %v76
    %v94 = vpop.xlane.xlu0 %93
    %95 = vadd.xlane.f32.xlu0 %v77
    %v96 = vpop.xlane.xlu0 %95
    %97 = vadd.xlane.f32.xlu0 %v78
    %v98 = vpop.xlane.xlu0 %97
    %99 = vadd.xlane.f32.xlu0 %v79
    %v100 = vpop.xlane.xlu0 %99
    %101 = vadd.xlane.f32.xlu0 %v80
    %v102 = vpop.xlane.xlu0 %101
    %103 = vadd.xlane.f32.xlu0 %v81
    %v104 = vpop.xlane.xlu0 %103
    %105 = vadd.xlane.f32.xlu0 %v82
    %v106 = vpop.xlane.xlu0 %105
    %107 = vadd.xlane.f32.xlu0 %v83
    %v108 = vpop.xlane.xlu0 %107
    %109 = vadd.xlane.f32.xlu0 %v84
    %v110 = vpop.xlane.xlu0 %109
    %111 = vadd.xlane.f32.xlu0 %v85
    %v112 = vpop.xlane.xlu0 %111
    %113 = vadd.xlane.f32.xlu0 %v86
    %v114 = vpop.xlane.xlu0 %113
    %115 = vadd.xlane.f32.xlu0 %v87
    %v116 = vpop.xlane.xlu0 %115
    %117 = vadd.xlane.f32.xlu0 %v88
    %v118 = vpop.xlane.xlu0 %117
    %119 = vadd.xlane.f32.xlu0 %v89
    %v120 = vpop.xlane.xlu0 %119
    %121 = vadd.xlane.f32.xlu0 %v90
    %v122 = vpop.xlane.xlu0 %121
    %v123 = vadd.f32 %v59, %v92
    %v124 = vadd.f32 %v60, %v94
    %v125 = vadd.f32 %v61, %v96
    %v126 = vadd.f32 %v62, %v98
    %v127 = vadd.f32 %v63, %v100
    %v128 = vadd.f32 %v64, %v102
    %v129 = vadd.f32 %v65, %v104
    %v130 = vadd.f32 %v66, %v106
    %v131 = vadd.f32 %v67, %v108
    %v132 = vadd.f32 %v68, %v110
    %v133 = vadd.f32 %v69, %v112
    %v134 = vadd.f32 %v70, %v114
    %v135 = vadd.f32 %v71, %v116
    %v136 = vadd.f32 %v72, %v118
    %v137 = vadd.f32 %v73, %v120
    %v138 = vadd.f32 %v74, %v122
    %vm139 = vcmask 7168
    %140 = vst.msk [vmem:[#allocation2] sm:$0xff] %vm139, %v123
    %141 = vst.msk [vmem:[#allocation2 + $0x8] sm:$0xff] %vm139, %v124
    %142 = vst.msk [vmem:[#allocation2 + $0x10] sm:$0xff] %vm139, %v125
    %143 = vst.msk [vmem:[#allocation2 + $0x18] sm:$0xff] %vm139, %v126
    %144 = vst.msk [vmem:[#allocation2 + $0x20] sm:$0xff] %vm139, %v127
    %145 = vst.msk [vmem:[#allocation2 + $0x28] sm:$0xff] %vm139, %v128
    %146 = vst.msk [vmem:[#allocation2 + $0x30] sm:$0xff] %vm139, %v129
    %147 = vst.msk [vmem:[#allocation2 + $0x38] sm:$0xff] %vm139, %v130
    %148 = vst.msk [vmem:[#allocation2 + $0x40] sm:$0xff] %vm139, %v131
    %149 = vst.msk [vmem:[#allocation2 + $0x48] sm:$0xff] %vm139, %v132
    %150 = vst.msk [vmem:[#allocation2 + $0x50] sm:$0xff] %vm139, %v133
    %151 = vst.msk [vmem:[#allocation2 + $0x58] sm:$0xff] %vm139, %v134
    %152 = vst.msk [vmem:[#allocation2 + $0x60] sm:$0xff] %vm139, %v135
    %153 = vst.msk [vmem:[#allocation2 + $0x68] sm:$0xff] %vm139, %v136
    %154 = vst.msk [vmem:[#allocation2 + $0x70] sm:$0xff] %vm139, %v137
    %155 = vst.msk [vmem:[#allocation2 + $0x78] sm:$0xff] %vm139, %v138
    // Predicated region
    $region14: #{tpu_custom_call.1} parent=1 // pred_check
      %p156 = pneg %p22
    $region15: #{tpu_custom_call.1} parent=1 // pred_check_branch
      %158 = sbr.rel (%p156) target = $region17
    $region16: #{tpu_custom_call.1} parent=1 // pred_region
      %v159 = vld [vmem:[#allocation2] sm:$0xff]
      %v160 = vld [vmem:[#allocation2 + $0x8] sm:$0xff]
      %v161 = vld [vmem:[#allocation2 + $0x10] sm:$0xff]
      %v162 = vld [vmem:[#allocation2 + $0x18] sm:$0xff]
      %v163 = vld [vmem:[#allocation2 + $0x20] sm:$0xff]
      %v164 = vld [vmem:[#allocation2 + $0x28] sm:$0xff]
      %v165 = vld [vmem:[#allocation2 + $0x30] sm:$0xff]
      %v166 = vld [vmem:[#allocation2 + $0x38] sm:$0xff]
      %v167 = vld [vmem:[#allocation2 + $0x40] sm:$0xff]
      %v168 = vld [vmem:[#allocation2 + $0x48] sm:$0xff]
      %v169 = vld [vmem:[#allocation2 + $0x50] sm:$0xff]
      %v170 = vld [vmem:[#allocation2 + $0x58] sm:$0xff]
      %v171 = vld [vmem:[#allocation2 + $0x60] sm:$0xff]
      %v172 = vld [vmem:[#allocation2 + $0x68] sm:$0xff]
      %v173 = vld [vmem:[#allocation2 + $0x70] sm:$0xff]
      %v174 = vld [vmem:[#allocation2 + $0x78] sm:$0xff]
      %v175 = vrsqrt.pop %v159
      %v176 = vmul.f32 %v159, %v175
      %vm177 = vcmp.eq.f32.partialorder %v159, inf
      %v178 = vsel %vm177, %v159, %v176
      %vm179 = vcmp.eq.f32.partialorder %v159, 0.0
      %v180 = vand.u32 %v159, 2147483648
      %v181 = vsel %vm179, %v180, %v178
      %v182 = vrsqrt.pop %v160
      %v183 = vmul.f32 %v160, %v182
      %vm184 = vcmp.eq.f32.partialorder %v160, inf
      %v185 = vsel %vm184, %v160, %v183
      %vm186 = vcmp.eq.f32.partialorder %v160, 0.0
      %v187 = vand.u32 %v160, 2147483648
      %v188 = vsel %vm186, %v187, %v185
      %v189 = vrsqrt.pop %v161
      %v190 = vmul.f32 %v161, %v189
      %vm191 = vcmp.eq.f32.partialorder %v161, inf
      %v192 = vsel %vm191, %v161, %v190
      %vm193 = vcmp.eq.f32.partialorder %v161, 0.0
      %v194 = vand.u32 %v161, 2147483648
      %v195 = vsel %vm193, %v194, %v192
      %v196 = vrsqrt.pop %v162
      %v197 = vmul.f32 %v162, %v196
      %vm198 = vcmp.eq.f32.partialorder %v162, inf
      %v199 = vsel %vm198, %v162, %v197
      %vm200 = vcmp.eq.f32.partialorder %v162, 0.0
      %v201 = vand.u32 %v162, 2147483648
      %v202 = vsel %vm200, %v201, %v199
      %v203 = vrsqrt.pop %v163
      %v204 = vmul.f32 %v163, %v203
      %vm205 = vcmp.eq.f32.partialorder %v163, inf
      %v206 = vsel %vm205, %v163, %v204
      %vm207 = vcmp.eq.f32.partialorder %v163, 0.0
      %v208 = vand.u32 %v163, 2147483648
      %v209 = vsel %vm207, %v208, %v206
      %v210 = vrsqrt.pop %v164
      %v211 = vmul.f32 %v164, %v210
      %vm212 = vcmp.eq.f32.partialorder %v164, inf
      %v213 = vsel %vm212, %v164, %v211
      %vm214 = vcmp.eq.f32.partialorder %v164, 0.0
      %v215 = vand.u32 %v164, 2147483648
      %v216 = vsel %vm214, %v215, %v213
      %v217 = vrsqrt.pop %v165
      %v218 = vmul.f32 %v165, %v217
      %vm219 = vcmp.eq.f32.partialorder %v165, inf
      %v220 = vsel %vm219, %v165, %v218
      %vm221 = vcmp.eq.f32.partialorder %v165, 0.0
      %v222 = vand.u32 %v165, 2147483648
      %v223 = vsel %vm221, %v222, %v220
      %v224 = vrsqrt.pop %v166
      %v225 = vmul.f32 %v166, %v224
      %vm226 = vcmp.eq.f32.partialorder %v166, inf
      %v227 = vsel %vm226, %v166, %v225
      %vm228 = vcmp.eq.f32.partialorder %v166, 0.0
      %v229 = vand.u32 %v166, 2147483648
      %v230 = vsel %vm228, %v229, %v227
      %v231 = vrsqrt.pop %v167
      %v232 = vmul.f32 %v167, %v231
      %vm233 = vcmp.eq.f32.partialorder %v167, inf
      %v234 = vsel %vm233, %v167, %v232
      %vm235 = vcmp.eq.f32.partialorder %v167, 0.0
      %v236 = vand.u32 %v167, 2147483648
      %v237 = vsel %vm235, %v236, %v234
      %v238 = vrsqrt.pop %v168
      %v239 = vmul.f32 %v168, %v238
      %vm240 = vcmp.eq.f32.partialorder %v168, inf
      %v241 = vsel %vm240, %v168, %v239
      %vm242 = vcmp.eq.f32.partialorder %v168, 0.0
      %v243 = vand.u32 %v168, 2147483648
      %v244 = vsel %vm242, %v243, %v241
      %v245 = vrsqrt.pop %v169
      %v246 = vmul.f32 %v169, %v245
      %vm247 = vcmp.eq.f32.partialorder %v169, inf
      %v248 = vsel %vm247, %v169, %v246
      %vm249 = vcmp.eq.f32.partialorder %v169, 0.0
      %v250 = vand.u32 %v169, 2147483648
      %v251 = vsel %vm249, %v250, %v248
      %v252 = vrsqrt.pop %v170
      %v253 = vmul.f32 %v170, %v252
      %vm254 = vcmp.eq.f32.partialorder %v170, inf
      %v255 = vsel %vm254, %v170, %v253
      %vm256 = vcmp.eq.f32.partialorder %v170, 0.0
      %v257 = vand.u32 %v170, 2147483648
      %v258 = vsel %vm256, %v257, %v255
      %v259 = vrsqrt.pop %v171
      %v260 = vmul.f32 %v171, %v259
      %vm261 = vcmp.eq.f32.partialorder %v171, inf
      %v262 = vsel %vm261, %v171, %v260
      %vm263 = vcmp.eq.f32.partialorder %v171, 0.0
      %v264 = vand.u32 %v171, 2147483648
      %v265 = vsel %vm263, %v264, %v262
      %v266 = vrsqrt.pop %v172
      %v267 = vmul.f32 %v172, %v266
      %vm268 = vcmp.eq.f32.partialorder %v172, inf
      %v269 = vsel %vm268, %v172, %v267
      %vm270 = vcmp.eq.f32.partialorder %v172, 0.0
      %v271 = vand.u32 %v172, 2147483648
      %v272 = vsel %vm270, %v271, %v269
      %v273 = vrsqrt.pop %v173
      %v274 = vmul.f32 %v173, %v273
      %vm275 = vcmp.eq.f32.partialorder %v173, inf
      %v276 = vsel %vm275, %v173, %v274
      %vm277 = vcmp.eq.f32.partialorder %v173, 0.0
      %v278 = vand.u32 %v173, 2147483648
      %v279 = vsel %vm277, %v278, %v276
      %v280 = vrsqrt.pop %v174
      %v281 = vmul.f32 %v174, %v280
      %vm282 = vcmp.eq.f32.partialorder %v174, inf
      %v283 = vsel %vm282, %v174, %v281
      %vm284 = vcmp.eq.f32.partialorder %v174, 0.0
      %v285 = vand.u32 %v174, 2147483648
      %v286 = vsel %vm284, %v285, %v283
      %v287 = vmul.f32 %v181, 0.17677669
      %v288 = vmul.f32 %v188, 0.17677669
      %v289 = vmul.f32 %v195, 0.17677669
      %v290 = vmul.f32 %v202, 0.17677669
      %v291 = vmul.f32 %v209, 0.17677669
      %v292 = vmul.f32 %v216, 0.17677669
      %v293 = vmul.f32 %v223, 0.17677669
      %v294 = vmul.f32 %v230, 0.17677669
      %v295 = vmul.f32 %v237, 0.17677669
      %v296 = vmul.f32 %v244, 0.17677669
      %v297 = vmul.f32 %v251, 0.17677669
      %v298 = vmul.f32 %v258, 0.17677669
      %v299 = vmul.f32 %v265, 0.17677669
      %v300 = vmul.f32 %v272, 0.17677669
      %v301 = vmul.f32 %v279, 0.17677669
      %v302 = vmul.f32 %v286, 0.17677669
      %v303 = vadd.f32 %v287, 0.0001
      %v304 = vadd.f32 %v288, 0.0001
      %v305 = vadd.f32 %v289, 0.0001
      %v306 = vadd.f32 %v290, 0.0001
      %v307 = vadd.f32 %v291, 0.0001
      %v308 = vadd.f32 %v292, 0.0001
      %v309 = vadd.f32 %v293, 0.0001
      %v310 = vadd.f32 %v294, 0.0001
      %v311 = vadd.f32 %v295, 0.0001
      %v312 = vadd.f32 %v296, 0.0001
      %v313 = vadd.f32 %v297, 0.0001
      %v314 = vadd.f32 %v298, 0.0001
      %v315 = vadd.f32 %v299, 0.0001
      %v316 = vadd.f32 %v300, 0.0001
      %v317 = vadd.f32 %v301, 0.0001
      %v318 = vadd.f32 %v302, 0.0001
      %v319 = vrcp.pop %v303
      %v320 = vmul.f32 0.17677669, %v319
      %v321 = vrcp.pop %v304
      %v322 = vmul.f32 0.17677669, %v321
      %v323 = vrcp.pop %v305
      %v324 = vmul.f32 0.17677669, %v323
      %v325 = vrcp.pop %v306
      %v326 = vmul.f32 0.17677669, %v325
      %v327 = vrcp.pop %v307
      %v328 = vmul.f32 0.17677669, %v327
      %v329 = vrcp.pop %v308
      %v330 = vmul.f32 0.17677669, %v329
      %v331 = vrcp.pop %v309
      %v332 = vmul.f32 0.17677669, %v331
      %v333 = vrcp.pop %v310
      %v334 = vmul.f32 0.17677669, %v333
      %v335 = vrcp.pop %v311
      %v336 = vmul.f32 0.17677669, %v335
      %v337 = vrcp.pop %v312
      %v338 = vmul.f32 0.17677669, %v337
      %v339 = vrcp.pop %v313
      %v340 = vmul.f32 0.17677669, %v339
      %v341 = vrcp.pop %v314
      %v342 = vmul.f32 0.17677669, %v341
      %v343 = vrcp.pop %v315
      %v344 = vmul.f32 0.17677669, %v343
      %v345 = vrcp.pop %v316
      %v346 = vmul.f32 0.17677669, %v345
      %v347 = vrcp.pop %v317
      %v348 = vmul.f32 0.17677669, %v347
      %v349 = vrcp.pop %v318
      %v350 = vmul.f32 0.17677669, %v349
      %351 = vst.msk [vmem:[%s1] sm:$0xff] %vm139, %v320
      %352 = vst.msk [vmem:[%s1 + $0x8] sm:$0xff] %vm139, %v322
      %353 = vst.msk [vmem:[%s1 + $0x10] sm:$0xff] %vm139, %v324
      %354 = vst.msk [vmem:[%s1 + $0x18] sm:$0xff] %vm139, %v326
      %355 = vst.msk [vmem:[%s1 + $0x20] sm:$0xff] %vm139, %v328
      %356 = vst.msk [vmem:[%s1 + $0x28] sm:$0xff] %vm139, %v330
      %357 = vst.msk [vmem:[%s1 + $0x30] sm:$0xff] %vm139, %v332
      %358 = vst.msk [vmem:[%s1 + $0x38] sm:$0xff] %vm139, %v334
      %359 = vst.msk [vmem:[%s1 + $0x40] sm:$0xff] %vm139, %v336
      %360 = vst.msk [vmem:[%s1 + $0x48] sm:$0xff] %vm139, %v338
      %361 = vst.msk [vmem:[%s1 + $0x50] sm:$0xff] %vm139, %v340
      %362 = vst.msk [vmem:[%s1 + $0x58] sm:$0xff] %vm139, %v342
      %363 = vst.msk [vmem:[%s1 + $0x60] sm:$0xff] %vm139, %v344
      %364 = vst.msk [vmem:[%s1 + $0x68] sm:$0xff] %vm139, %v346
      %365 = vst.msk [vmem:[%s1 + $0x70] sm:$0xff] %vm139, %v348
      %366 = vst.msk [vmem:[%s1 + $0x78] sm:$0xff] %vm139, %v350
    $region17: #{tpu_custom_call.1} parent=1 // pred_fallthru
      _
    // Predicated region
    $region18: #{tpu_custom_call.1} parent=1 // pred_check
      _
    $region19: #{tpu_custom_call.1} parent=1 // pred_check_branch
      %368 = sbr.rel (0) target = $region21
    $region20: #{tpu_custom_call.1} parent=1 // pred_region
      _
    $region21: #{tpu_custom_call.1} parent=1 // pred_fallthru
      _
    // Predicated region
    $region22: #{tpu_custom_call.1} parent=1 // pred_check
      _
    $region23: #{tpu_custom_call.1} parent=1 // pred_check_branch
      %370 = sbr.rel (0) target = $region25
    $region24: #{tpu_custom_call.1} parent=1 // pred_region
      _
    $region25: #{tpu_custom_call.1} parent=1 // pred_fallthru
      _
    %371 = vsyncpa [#allocation4], 1

</llo_original>
